<compile_context>
chip_gen: v7x
topology: tpu7x:2x2x1
jax: 0.10.0
libtpu: 0.0.40
codegen_flags: <defaults>
</compile_context>

<pallas_src>
import numpy as np
import jax
import jax.numpy as jnp
from jax import lax
from jax.experimental import pallas as pl
from jax.experimental.pallas import tpu as pltpu

NBIN = 16            # number of angle bins
NBIN_PAD = 128       # lane-dense padded logits width
DROPOUT_P = 0.25
NEG_BIG = -1e9       # bias for padded bins (exp underflows to exactly 0)


def angle_head_loss_kernel(xcat_ref, drop_ref, lab_ref, p1_ref, p2_ref, loss_ref):
    # p1 = [W1 (3H,H) ; b1 (1,H)],  p2 = [W2|0 (H,NBIN_PAD) ; b2|-1e9 (1,NBIN_PAD)]
    s = xcat_ref.shape[0]
    h3 = p1_ref.shape[0] - 1
    hid = p1_ref.shape[1]

    # Fused Linear(3H -> H): one bf16 MXU matmul, f32 accumulation.
    h = (jnp.dot(xcat_ref[...], p1_ref[:h3, :],
                 preferred_element_type=jnp.float32)
         + p1_ref[h3:, :].astype(jnp.float32))

    # Dropout(p=0.25), training semantics: host-precomputed mask {0, 1/(1-p)}.
    h = h * drop_ref[...]

    # Linear(H -> NBIN), lane-padded to NBIN_PAD output bins.
    logits = (jnp.dot(h.astype(jnp.bfloat16), p2_ref[:hid, :],
                      preferred_element_type=jnp.float32)
              + p2_ref[hid:, :].astype(jnp.float32))

    # NLL(log_softmax(logits))[label], mean — without materializing logp:
    #   loss_i = logsumexp(logits_i) - logits_i[label_i]
    m = jnp.max(logits, axis=-1, keepdims=True)
    lse = m + jnp.log(jnp.sum(jnp.exp(logits - m), axis=-1, keepdims=True))
    onehot = (lab_ref[...] ==
              lax.broadcasted_iota(jnp.int32, logits.shape, 1)).astype(jnp.float32)
    picked = jnp.sum(logits * onehot, axis=-1, keepdims=True)
    nll = lse - picked                                             # (S, 1)
    loss_ref[...] = jnp.sum(nll, axis=0, keepdims=True) * (1.0 / s)


@jax.jit
def angle_head_loss(xcat, drop_scale, labels, p1, p2):
    out = pl.pallas_call(
        angle_head_loss_kernel,
        out_shape=jax.ShapeDtypeStruct((1, 1), jnp.float32),
        in_specs=[pl.BlockSpec(memory_space=pltpu.MemorySpace.VMEM)] * 5,
        out_specs=pl.BlockSpec(memory_space=pltpu.MemorySpace.VMEM),
    )(xcat, drop_scale, labels, p1, p2)
    return out[0, 0]


def reference_loss(xcat, drop_scale, labels, p1, p2):
    """Pure-JAX reference using the same bf16-rounded operands as the kernel."""
    h3 = p1.shape[0] - 1
    hid = p1.shape[1]
    w1 = p1[:h3].astype(jnp.float32)
    b1 = p1[h3:].astype(jnp.float32)
    w2 = p2[:hid].astype(jnp.float32)
    b2 = p2[hid:].astype(jnp.float32)
    h = xcat.astype(jnp.float32) @ w1 + b1
    h = h * drop_scale
    logits = h.astype(jnp.bfloat16).astype(jnp.float32) @ w2 + b2
    logp = jax.nn.log_softmax(logits, axis=-1)
    s = labels.shape[0]
    return -jnp.mean(logp[jnp.arange(s), labels[:, 0]])


if __name__ == "__main__":
    N, F_IN, H, S = 64, 16, 32, 128      # nodes, node-feature dim, hiddens[-1], num_samples
    key = jax.random.PRNGKey(0)
    k_coords, k_feat, k_enc, k_w1, k_b1, k_w2, k_b2, k_drop = jax.random.split(key, 8)

    coords = jax.random.normal(k_coords, (N, 3), jnp.float32)      # data.coords_tensor
    node_feat = jax.random.normal(k_feat, (N, F_IN), jnp.float32)

    # --- get_angle_samples stand-in: synthetic graph -> (center, nbr_i, nbr_j) triplets ---
    # TODO(synk): torch_geometric degree/to_dense_adj/unique pipeline is data-dependent
    # host-side index bookkeeping; reproduced with a simple deterministic numpy version.
    rng = np.random.default_rng(0)
    total_samples = []
    for c in range(N):
        nbrs = np.sort(rng.choice(np.delete(np.arange(N), c), size=4, replace=False))
        total_samples.append((c, nbrs[0], nbrs[1]))
        total_samples.append((c, nbrs[1], nbrs[2]))
    total_samples = np.unique(np.array(total_samples, dtype=np.int32), axis=0)

    # --- sample_data ---
    # TODO(synk): the torch version dedups the sampled indices via a boolean mask
    # (variable sample count / loss denominator); a fixed S keeps kernel shapes static.
    idx = rng.choice(len(total_samples), S)
    masked_samples = jnp.asarray(total_samples[idx])               # (S, 3)

    # --- get_masked_label: angle at the center node, binned into NBIN bins over [0, pi] ---
    p0 = coords[masked_samples[:, 0]]
    p1c = coords[masked_samples[:, 1]]
    p2c = coords[masked_samples[:, 2]]
    v1, v2 = p1c - p0, p2c - p0
    cos = jnp.sum(v1 * v2, -1) / (jnp.linalg.norm(v1, axis=-1) *
                                  jnp.linalg.norm(v2, axis=-1) + 1e-8)
    ang = jnp.arccos(jnp.clip(cos, -1.0, 1.0))
    labels = jnp.clip((ang / jnp.pi * NBIN).astype(jnp.int32), 0, NBIN - 1).reshape(S, 1)

    # --- encoder stand-in (external module): deterministic linear + relu ---
    w_enc = jax.random.normal(k_enc, (F_IN, H), jnp.float32) * 0.1
    x = jax.nn.relu(node_feat @ w_enc)                             # (N, H) node embeddings

    # Fused triplet gather + concat: single (S, 3H) block == torch.cat([x0, x1, x2], -1).
    # TODO(synk): at production sizes move this gather in-kernel (scalar-prefetch / DMA
    # gather) and fuse the whole head into the encoder kernel instead of a standalone call.
    xcat = x[masked_samples].reshape(S, 3 * H).astype(jnp.bfloat16)

    # --- mlp_heads parameters: Linear(3H, H), Dropout(0.25), Linear(H, NBIN) ---
    w1 = jax.random.normal(k_w1, (3 * H, H), jnp.float32) * (1.0 / np.sqrt(3 * H))
    b1 = jax.random.normal(k_b1, (1, H), jnp.float32) * 0.01
    w2 = jax.random.normal(k_w2, (H, NBIN), jnp.float32) * (1.0 / np.sqrt(H))
    b2 = jax.random.normal(k_b2, (1, NBIN), jnp.float32) * 0.01

    # Pack params into two contiguous bf16 arrays; lane-pad the classifier to NBIN_PAD.
    w2p = jnp.zeros((H, NBIN_PAD), jnp.float32).at[:, :NBIN].set(w2)
    b2p = jnp.full((1, NBIN_PAD), NEG_BIG, jnp.float32).at[:, :NBIN].set(b2)
    p1 = jnp.concatenate([w1, b1], axis=0).astype(jnp.bfloat16)    # (3H+1, H)
    p2 = jnp.concatenate([w2p, b2p], axis=0).astype(jnp.bfloat16)  # (H+1, NBIN_PAD)

    # --- dropout mask (training semantics); caller must use a fresh key each step ---
    keep = jax.random.bernoulli(k_drop, 1.0 - DROPOUT_P, (S, H))
    drop_scale = keep.astype(jnp.float32) / (1.0 - DROPOUT_P)

    loss = angle_head_loss(xcat, drop_scale, labels, p1, p2)
    jax.block_until_ready(loss)

    ref = reference_loss(xcat, drop_scale, labels, p1, p2)
    assert bool(jnp.isfinite(loss))
    assert abs(float(loss) - float(ref)) < 0.05, (float(loss), float(ref))
    print("KERNEL_OK")
</pallas_src>

<mosaic_0001>
module attributes {stable_mosaic.version = 11 : i64} {
  func.func @angle_head_loss_kernel(%arg0: memref<128x96xbf16, #tpu.memory_space<vmem>>, %arg1: memref<128x32xf32, #tpu.memory_space<vmem>>, %arg2: memref<128x1xi32, #tpu.memory_space<vmem>>, %arg3: memref<97x32xbf16, #tpu.memory_space<vmem>>, %arg4: memref<33x128xbf16, #tpu.memory_space<vmem>>, %arg5: memref<1x1xf32, #tpu.memory_space<vmem>>) attributes {dimension_semantics = [], scalar_prefetch = 0 : i64, scratch_operands = 0 : i64, tpu.core_type = #tpu.core_type<tc>} {
    %c0 = arith.constant 0 : index
    %c0_0 = arith.constant 0 : index
    %0 = vector.load %arg0[%c0, %c0_0] : memref<128x96xbf16, #tpu.memory_space<vmem>>, vector<128x96xbf16>
    %c0_1 = arith.constant 0 : index
    %c0_2 = arith.constant 0 : index
    %1 = vector.load %arg3[%c0_1, %c0_2] : memref<97x32xbf16, #tpu.memory_space<vmem>>, vector<96x32xbf16>
    %cst = arith.constant dense<0.000000e+00> : vector<128x32xf32>
    %2 = tpu.matmul %0, %1, %cst {dimension_numbers = #tpu.dot_dimension_numbers<[1], [0], [0], [1], [0, 0, 1, 1], [], []>} : vector<128x96xbf16>, vector<96x32xbf16>, vector<128x32xf32> -> vector<128x32xf32>
    %c96 = arith.constant 96 : index
    %c0_3 = arith.constant 0 : index
    %3 = vector.load %arg3[%c96, %c0_3] : memref<97x32xbf16, #tpu.memory_space<vmem>>, vector<1x32xbf16>
    %4 = arith.extf %3 : vector<1x32xbf16> to vector<1x32xf32>
    %5 = vector.broadcast %4 : vector<1x32xf32> to vector<128x32xf32>
    %6 = arith.addf %2, %5 : vector<128x32xf32>
    %c0_4 = arith.constant 0 : index
    %c0_5 = arith.constant 0 : index
    %7 = vector.load %arg1[%c0_4, %c0_5] : memref<128x32xf32, #tpu.memory_space<vmem>>, vector<128x32xf32>
    %8 = arith.mulf %6, %7 : vector<128x32xf32>
    %9 = arith.truncf %8 : vector<128x32xf32> to vector<128x32xbf16>
    %c0_6 = arith.constant 0 : index
    %c0_7 = arith.constant 0 : index
    %10 = vector.load %arg4[%c0_6, %c0_7] : memref<33x128xbf16, #tpu.memory_space<vmem>>, vector<32x128xbf16>
    %cst_8 = arith.constant dense<0.000000e+00> : vector<128x128xf32>
    %11 = tpu.matmul %9, %10, %cst_8 {dimension_numbers = #tpu.dot_dimension_numbers<[1], [0], [0], [1], [0, 0, 1, 1], [], []>} : vector<128x32xbf16>, vector<32x128xbf16>, vector<128x128xf32> -> vector<128x128xf32>
    %c32 = arith.constant 32 : index
    %c0_9 = arith.constant 0 : index
    %12 = vector.load %arg4[%c32, %c0_9] : memref<33x128xbf16, #tpu.memory_space<vmem>>, vector<1x128xbf16>
    %13 = arith.extf %12 : vector<1x128xbf16> to vector<1x128xf32>
    %14 = vector.broadcast %13 : vector<1x128xf32> to vector<128x128xf32>
    %15 = arith.addf %11, %14 : vector<128x128xf32>
    %cst_10 = arith.constant dense<0xFF800000> : vector<128xf32>
    %16 = vector.multi_reduction <maximumf>, %15, %cst_10 [1] : vector<128x128xf32> to vector<128xf32>
    %17 = vector.shape_cast %16 : vector<128xf32> to vector<128x1xf32>
    %18 = vector.broadcast %17 : vector<128x1xf32> to vector<128x128xf32>
    %19 = arith.subf %15, %18 : vector<128x128xf32>
    %20 = math.exp %19 : vector<128x128xf32>
    %cst_11 = arith.constant dense<0.000000e+00> : vector<128xf32>
    %21 = vector.multi_reduction <add>, %20, %cst_11 [1] : vector<128x128xf32> to vector<128xf32>
    %22 = vector.shape_cast %21 : vector<128xf32> to vector<128x1xf32>
    %23 = math.log %22 : vector<128x1xf32>
    %24 = arith.addf %17, %23 : vector<128x1xf32>
    %c0_12 = arith.constant 0 : index
    %c0_13 = arith.constant 0 : index
    %25 = vector.load %arg2[%c0_12, %c0_13] : memref<128x1xi32, #tpu.memory_space<vmem>>, vector<128x1xi32>
    %26 = tpu.iota {dimensions = array<i32: 1>} : vector<128x128xi32>
    %27 = vector.broadcast %25 : vector<128x1xi32> to vector<128x128xi32>
    %28 = arith.cmpi eq, %27, %26 : vector<128x128xi32>
    %29 = arith.extui %28 : vector<128x128xi1> to vector<128x128xi32>
    %30 = arith.sitofp %29 : vector<128x128xi32> to vector<128x128xf32>
    %31 = arith.mulf %15, %30 : vector<128x128xf32>
    %cst_14 = arith.constant dense<0.000000e+00> : vector<128xf32>
    %32 = vector.multi_reduction <add>, %31, %cst_14 [1] : vector<128x128xf32> to vector<128xf32>
    %33 = vector.shape_cast %32 : vector<128xf32> to vector<128x1xf32>
    %34 = arith.subf %24, %33 : vector<128x1xf32>
    %cst_15 = arith.constant dense<0.000000e+00> : vector<1xf32>
    %35 = vector.multi_reduction <add>, %34, %cst_15 [0] : vector<128x1xf32> to vector<1xf32>
    %36 = vector.shape_cast %35 : vector<1xf32> to vector<1x1xf32>
    %cst_16 = arith.constant 7.812500e-03 : f32
    %37 = vector.broadcast %cst_16 : f32 to vector<1x1xf32>
    %38 = arith.mulf %36, %37 : vector<1x1xf32>
    %c0_17 = arith.constant 0 : index
    %c0_18 = arith.constant 0 : index
    %39 = vector.load %arg5[%c0_17, %c0_18] : memref<1x1xf32, #tpu.memory_space<vmem>>, vector<1x1xf32>
    tpu.vector_store %arg5[%c0_17, %c0_18], %38 {strides = array<i32>} : memref<1x1xf32, #tpu.memory_space<vmem>>, vector<1x1xf32>,
    return
  }
}

</mosaic_0001>

<llo_original>
// kernel: angle_head_loss.1
$region0: #{angle_head_loss.1}
  #allocation0 [shape = 'u32[]', space=smem, size = 0x4, offset = 0x4, fixed_abs, tag = 'smem constant byte address 0x4 - core index']
  #allocation1 [shape = 'u32[144,128]{1,0:T(1,128)}', space=vmem, size = 0x12000, scoped, tag = 'internal scratch']
  %s0 = inlined_call_operand.vmem [shape: bf16[128,96], index: 0, kind: input, shape index: {}]
  %s1 = inlined_call_operand.vmem [shape: f32[128,32], index: 1, kind: input, shape index: {}]
  %s2 = inlined_call_operand.vmem [shape: s32[128,1], index: 2, kind: input, shape index: {}]
  %s3 = inlined_call_operand.vmem [shape: bf16[97,32], index: 3, kind: input, shape index: {}]
  %s4 = inlined_call_operand.vmem [shape: bf16[33,128], index: 4, kind: input, shape index: {}]
  %s5 = inlined_call_operand.hbm [shape: f32[1,1], index: 5, kind: output, shape index: {}]
  %s6 = sld [smem:[#allocation0]]
  $region30: #{angle_head_loss.1} parent=0
    _
  %s8 = ssub.s32 1, %s6
  %s9 = scalar_select 0, %s8, %s6
  $region1: #{angle_head_loss.1} parent=0
    #allocation2 [shape = 'u8[512]{0}', space=vmem, size = 0x400, scoped, tag = 'output window, operand 0, single buffered']
    #allocation3 [shape = 's32[1]{0}', space=sflag, size = 0x4, scoped, tag = 'scoped memory for angle_head_loss.1']
    %10 = vsyncpa [#allocation3], 0
    // Predicated region
    $region2: #{angle_head_loss.1} parent=1 // pred_check
      _
    $region3: #{angle_head_loss.1} parent=1 // pred_check_branch
      %12 = sbr.rel (0) target = $region5
    $region4: #{angle_head_loss.1} parent=1 // pred_region
      _
    $region5: #{angle_head_loss.1} parent=1 // pred_fallthru
      _
    // Predicated region
    $region6: #{angle_head_loss.1} parent=1 // pred_check
      _
    $region7: #{angle_head_loss.1} parent=1 // pred_check_branch
      %14 = sbr.rel (0) target = $region9
    $region8: #{angle_head_loss.1} parent=1 // pred_region
      _
    $region9: #{angle_head_loss.1} parent=1 // pred_fallthru
      _
    // Predicated region
    $region10: #{angle_head_loss.1} parent=1 // pred_check
      _
    $region11: #{angle_head_loss.1} parent=1 // pred_check_branch
      %16 = sbr.rel (0) target = $region13
    $region12: #{angle_head_loss.1} parent=1 // pred_region
      _
    $region13: #{angle_head_loss.1} parent=1 // pred_fallthru
      _
    // Predicated region
    $region14: #{angle_head_loss.1} parent=1 // pred_check
      _
    $region15: #{angle_head_loss.1} parent=1 // pred_check_branch
      %18 = sbr.rel (0) target = $region17
    $region16: #{angle_head_loss.1} parent=1 // pred_region
      _
    $region17: #{angle_head_loss.1} parent=1 // pred_fallthru
      _
    // Predicated region
    $region18: #{angle_head_loss.1} parent=1 // pred_check
      _
    $region19: #{angle_head_loss.1} parent=1 // pred_check_branch
      %20 = sbr.rel (0) target = $region21
    $region20: #{angle_head_loss.1} parent=1 // pred_region
      _
    $region21: #{angle_head_loss.1} parent=1 // pred_fallthru
      _
    %v22 = vld [vmem:[%s0] sm:$0xf]
    %v23 = vld [vmem:[%s0 + $0x4] sm:$0xf]
    %v24 = vld [vmem:[%s0 + $0x8] sm:$0xf]
    %v25 = vld [vmem:[%s0 + $0xc] sm:$0xf]
    %v26 = vld [vmem:[%s0 + $0x10] sm:$0xf]
    %v27 = vld [vmem:[%s0 + $0x14] sm:$0xf]
    %v28 = vld [vmem:[%s0 + $0x18] sm:$0xf]
    %v29 = vld [vmem:[%s0 + $0x1c] sm:$0xf]
    %v30 = vld [vmem:[%s0 + $0x20] sm:$0xf]
    %v31 = vld [vmem:[%s0 + $0x24] sm:$0xf]
    %v32 = vld [vmem:[%s0 + $0x28] sm:$0xf]
    %v33 = vld [vmem:[%s0 + $0x2c] sm:$0xf]
    %v34 = vld [vmem:[%s0 + $0x30] sm:$0xf]
    %v35 = vld [vmem:[%s0 + $0x34] sm:$0xf]
    %v36 = vld [vmem:[%s0 + $0x38] sm:$0xf]
    %v37 = vld [vmem:[%s0 + $0x3c] sm:$0xf]
    %v38 = vld [vmem:[%s3] sm:$0xf]
    %v39 = vld [vmem:[%s3 + $0x4] sm:$0xf]
    %v40 = vld [vmem:[%s3 + $0x8] sm:$0xf]
    %v41 = vld [vmem:[%s3 + $0xc] sm:$0xf]
    %v42 = vld [vmem:[%s3 + $0x10] sm:$0xf]
    %v43 = vld [vmem:[%s3 + $0x14] sm:$0xf]
    %v44 = vld [vmem:[%s3 + $0x18] sm:$0xf]
    %v45 = vld [vmem:[%s3 + $0x1c] sm:$0xf]
    %v46 = vld [vmem:[%s3 + $0x20] sm:$0xf]
    %v47 = vld [vmem:[%s3 + $0x24] sm:$0xf]
    %v48 = vld [vmem:[%s3 + $0x28] sm:$0xf]
    %v49 = vld [vmem:[%s3 + $0x2c] sm:$0xf]
    %v50 = vld [vmem:[%s3 + $0x30] sm:$0x1]
    %v51 = vunpack.c.l.bf16 %v50
    %v52 = vlaneseq
    %v53 = vshrl.u32 %v52, 7
    %v54 = vsub.s32 0, %v53
    %v55 = vrot.slane %v51, %v54
    %v72 = vunpack.c.l.b16 %v22
    %v73 = vunpack.c.l.b16 %v23
    %v74 = vunpack.c.l.b16 %v24
    %v75 = vunpack.c.l.b16 %v25
    %v76 = vunpack.c.l.b16 %v26
    %v77 = vunpack.c.l.b16 %v27
    %v78 = vunpack.c.l.b16 %v28
    %v79 = vunpack.c.l.b16 %v29
    %v80 = vunpack.c.l.b16 %v30
    %v81 = vunpack.c.l.b16 %v31
    %v82 = vunpack.c.l.b16 %v32
    %v83 = vunpack.c.l.b16 %v33
    %v84 = vunpack.c.l.b16 %v34
    %v85 = vunpack.c.l.b16 %v35
    %v86 = vunpack.c.l.b16 %v36
    %v87 = vunpack.c.l.b16 %v37
    %v88 = vpack.c.b16 %v73, %v72
    %v89 = vpack.c.b16 %v75, %v74
    %v90 = vpack.c.b16 %v77, %v76
    %v91 = vpack.c.b16 %v79, %v78
    %v92 = vpack.c.b16 %v81, %v80
    %v93 = vpack.c.b16 %v83, %v82
    %v94 = vpack.c.b16 %v85, %v84
    %v95 = vpack.c.b16 %v87, %v86
    %v108 = vunpack.c.l.b16 %v38
    %v109 = vunpack.c.l.b16 %v39
    %v110 = vunpack.c.l.b16 %v40
    %v111 = vunpack.c.l.b16 %v41
    %v112 = vunpack.c.l.b16 %v42
    %v113 = vunpack.c.l.b16 %v43
    %v114 = vunpack.c.l.b16 %v44
    %v115 = vunpack.c.l.b16 %v45
    %v116 = vunpack.c.l.b16 %v46
    %v117 = vunpack.c.l.b16 %v47
    %v118 = vunpack.c.l.b16 %v48
    %v119 = vunpack.c.l.b16 %v49
    %v120 = vpack.c.b16 %v109, %v108
    %v121 = vpack.c.b16 %v111, %v110
    %v122 = vpack.c.b16 %v113, %v112
    %v123 = vpack.c.b16 %v115, %v114
    %v124 = vpack.c.b16 %v117, %v116
    %v125 = vpack.c.b16 %v119, %v118
    %vm132 = vcmask 785408
    %v134 = vsel %vm132, %v88, 0
    %v137 = vsel %vm132, %v89, 0
    %v140 = vsel %vm132, %v90, 0
    %v143 = vsel %vm132, %v91, 0
    %v146 = vsel %vm132, %v92, 0
    %v149 = vsel %vm132, %v93, 0
    %v152 = vsel %vm132, %v94, 0
    %v155 = vsel %vm132, %v95, 0
    %157 = vmatprep.subr.bf16.mxu0 0
    %158 = vmatpush1.bf16.msra.mxu0 %v120
    %159 = vmatprep.subr.bf16.mxu0 0
    %160 = vmatpush1.bf16.msra.mxu0 %v121
    %161 = vmatprep.subr.bf16.mxu0 0
    %162 = vmatpush1.bf16.msra.mxu0 %v122
    %163 = vmatprep.subr.bf16.mxu0 0
    %164 = vmatpush1.bf16.msra.mxu0 %v123
    %165 = vmatprep.subr.bf16.mxu0 0
    %166 = vmatpush1.bf16.msra.mxu0 %v124
    %167 = vmatprep.subr.bf16.mxu0 0
    %168 = vmatpush1.bf16.msra.mxu0 %v125
    %169 = vmatprep.subr.bf16.mxu0 0
    %170 = vmatpush1.bf16.msra.mxu0 0
    %171 = vmatprep.subr.bf16.mxu0 0
    %172 = vmatpush1.bf16.msra.mxu0 0
    %173 = vmatprep.subr.bf16.mxu0 0
    %174 = vmatpush1.bf16.msra.mxu0 0
    %175 = vmatprep.subr.bf16.mxu0 0
    %176 = vmatpush1.bf16.msra.mxu0 0
    %177 = vmatprep.subr.bf16.mxu0 0
    %178 = vmatpush1.bf16.msra.mxu0 0
    %179 = vmatprep.subr.bf16.mxu0 0
    %180 = vmatpush1.bf16.msra.mxu0 0
    %181 = vmatprep.subr.bf16.mxu0 0
    %182 = vmatpush1.bf16.msra.mxu0 0
    %183 = vmatprep.subr.bf16.mxu0 0
    %184 = vmatpush1.bf16.msra.mxu0 0
    %185 = vmatprep.subr.bf16.mxu0 0
    %186 = vmatpush1.bf16.msra.mxu0 0
    %187 = vmatprep.subr.bf16.mxu0 0
    %188 = vmatpush1.bf16.msra.mxu0 0
    %189 = vmatprep.mubr.bf16.mxu0 0
    %190 = vmatmul.mubr.bf16.gmra.mrb[0].mxu0 %v134
    %v191 = vpop.f32.mrb[0].mxu0
    %v192 = vadd.f32 %v55, %v191
    %v193 = vpop.f32.mrb[0].mxu0
    %v194 = vpop.f32.mrb[0].mxu0
    %v195 = vadd.f32 %v55, %v194
    %v196 = vpop.f32.mrb[0].mxu0
    %197 = vmatprep.mubr.bf16.mxu0 0
    %198 = vmatmul.mubr.bf16.gmra.mrb[0].mxu0 %v137
    %v199 = vpop.f32.mrb[0].mxu0
    %v200 = vadd.f32 %v55, %v199
    %v201 = vpop.f32.mrb[0].mxu0
    %v202 = vpop.f32.mrb[0].mxu0
    %v203 = vadd.f32 %v55, %v202
    %v204 = vpop.f32.mrb[0].mxu0
    %205 = vmatprep.mubr.bf16.mxu0 0
    %206 = vmatmul.mubr.bf16.gmra.mrb[0].mxu0 %v140
    %v207 = vpop.f32.mrb[0].mxu0
    %v208 = vadd.f32 %v55, %v207
    %v209 = vpop.f32.mrb[0].mxu0
    %v210 = vpop.f32.mrb[0].mxu0
    %v211 = vadd.f32 %v55, %v210
    %v212 = vpop.f32.mrb[0].mxu0
    %213 = vmatprep.mubr.bf16.mxu0 0
    %214 = vmatmul.mubr.bf16.gmra.mrb[0].mxu0 %v143
    %v215 = vpop.f32.mrb[0].mxu0
    %v216 = vadd.f32 %v55, %v215
    %v217 = vpop.f32.mrb[0].mxu0
    %v218 = vpop.f32.mrb[0].mxu0
    %v219 = vadd.f32 %v55, %v218
    %v220 = vpop.f32.mrb[0].mxu0
    %221 = vmatprep.mubr.bf16.mxu0 0
    %222 = vmatmul.mubr.bf16.gmra.mrb[0].mxu0 %v146
    %v223 = vpop.f32.mrb[0].mxu0
    %v224 = vadd.f32 %v55, %v223
    %v225 = vpop.f32.mrb[0].mxu0
    %v226 = vpop.f32.mrb[0].mxu0
    %v227 = vadd.f32 %v55, %v226
    %v228 = vpop.f32.mrb[0].mxu0
    %229 = vmatprep.mubr.bf16.mxu0 0
    %230 = vmatmul.mubr.bf16.gmra.mrb[0].mxu0 %v149
    %v231 = vpop.f32.mrb[0].mxu0
    %v232 = vadd.f32 %v55, %v231
    %v233 = vpop.f32.mrb[0].mxu0
    %v234 = vpop.f32.mrb[0].mxu0
    %v235 = vadd.f32 %v55, %v234
    %v236 = vpop.f32.mrb[0].mxu0
    %237 = vmatprep.mubr.bf16.mxu0 0
    %238 = vmatmul.mubr.bf16.gmra.mrb[0].mxu0 %v152
    %v239 = vpop.f32.mrb[0].mxu0
    %v240 = vadd.f32 %v55, %v239
    %v241 = vpop.f32.mrb[0].mxu0
    %v242 = vpop.f32.mrb[0].mxu0
    %v243 = vadd.f32 %v55, %v242
    %v244 = vpop.f32.mrb[0].mxu0
    %245 = vmatprep.mubr.bf16.mxu0 0
    %246 = vmatmul.mubr.bf16.gmra.mrb[0].mxu0 %v155
    %v247 = vpop.f32.mrb[0].mxu0
    %v248 = vadd.f32 %v55, %v247
    %v249 = vpop.f32.mrb[0].mxu0
    %v250 = vpop.f32.mrb[0].mxu0
    %v251 = vadd.f32 %v55, %v250
    %v252 = vpop.f32.mrb[0].mxu0
    %253 = vdwg.mxu0
    %v254 = vld [vmem:[%s1] sm:$0xff]
    %v255 = vld [vmem:[%s1 + $0x8] sm:$0xff]
    %v256 = vld [vmem:[%s1 + $0x10] sm:$0xff]
    %v257 = vld [vmem:[%s1 + $0x18] sm:$0xff]
    %v258 = vld [vmem:[%s1 + $0x20] sm:$0xff]
    %v259 = vld [vmem:[%s1 + $0x28] sm:$0xff]
    %v260 = vld [vmem:[%s1 + $0x30] sm:$0xff]
    %v261 = vld [vmem:[%s1 + $0x38] sm:$0xff]
    %v262 = vld [vmem:[%s1 + $0x40] sm:$0xff]
    %v263 = vld [vmem:[%s1 + $0x48] sm:$0xff]
    %v264 = vld [vmem:[%s1 + $0x50] sm:$0xff]
    %v265 = vld [vmem:[%s1 + $0x58] sm:$0xff]
    %v266 = vld [vmem:[%s1 + $0x60] sm:$0xff]
    %v267 = vld [vmem:[%s1 + $0x68] sm:$0xff]
    %v268 = vld [vmem:[%s1 + $0x70] sm:$0xff]
    %v269 = vld [vmem:[%s1 + $0x78] sm:$0xff]
    %v270 = vmul.f32 %v192, %v254
    %v271 = vmul.f32 %v195, %v255
    %v272 = vmul.f32 %v200, %v256
    %v273 = vmul.f32 %v203, %v257
    %v274 = vmul.f32 %v208, %v258
    %v275 = vmul.f32 %v211, %v259
    %v276 = vmul.f32 %v216, %v260
    %v277 = vmul.f32 %v219, %v261
    %v278 = vmul.f32 %v224, %v262
    %v279 = vmul.f32 %v227, %v263
    %v280 = vmul.f32 %v232, %v264
    %v281 = vmul.f32 %v235, %v265
    %v282 = vmul.f32 %v240, %v266
    %v283 = vmul.f32 %v243, %v267
    %v284 = vmul.f32 %v248, %v268
    %v285 = vmul.f32 %v251, %v269
    %v286 = vpack.c.bf16 %v271, %v270
    %v287 = vpack.c.bf16 %v273, %v272
    %v288 = vpack.c.bf16 %v275, %v274
    %v289 = vpack.c.bf16 %v277, %v276
    %v290 = vpack.c.bf16 %v279, %v278
    %v291 = vpack.c.bf16 %v281, %v280
    %v292 = vpack.c.bf16 %v283, %v282
    %v293 = vpack.c.bf16 %v285, %v284
    %v294 = vld [vmem:[%s4] sm:$0xf]
    %v295 = vld [vmem:[%s4 + $0x4] sm:$0xf]
    %v296 = vld [vmem:[%s4 + $0x8] sm:$0xf]
    %v297 = vld [vmem:[%s4 + $0xc] sm:$0xf]
    %v298 = vld [vmem:[%s4 + $0x10] sm:$0x1]
    %v299 = vunpack.c.l.bf16 %v298
    %v300 = vlaneseq
    %v301 = vshrl.u32 %v300, 7
    %v302 = vsub.s32 0, %v301
    %v303 = vrot.slane %v299, %v302
    %v308 = vunpack.c.l.b16 %v294
    %v309 = vunpack.c.l.b16 %v295
    %v310 = vunpack.c.l.b16 %v296
    %v311 = vunpack.c.l.b16 %v297
    %v312 = vpack.c.b16 %v309, %v308
    %v313 = vpack.c.b16 %v311, %v310
    %vm316 = vcmask 261120
    %v318 = vsel %vm316, %v286, 0
    %v321 = vsel %vm316, %v287, 0
    %v324 = vsel %vm316, %v288, 0
    %v327 = vsel %vm316, %v289, 0
    %v330 = vsel %vm316, %v290, 0
    %v333 = vsel %vm316, %v291, 0
    %v336 = vsel %vm316, %v292, 0
    %v339 = vsel %vm316, %v293, 0
    %341 = vmatprep.subr.bf16.mxu0 0
    %342 = vmatpush1.bf16.msra.mxu0 %v312
    %343 = vmatprep.subr.bf16.mxu0 0
    %344 = vmatpush1.bf16.msra.mxu0 %v313
    %345 = vmatprep.subr.bf16.mxu0 0
    %346 = vmatpush1.bf16.msra.mxu0 0
    %347 = vmatprep.subr.bf16.mxu0 0
    %348 = vmatpush1.bf16.msra.mxu0 0
    %349 = vmatprep.subr.bf16.mxu0 0
    %350 = vmatpush1.bf16.msra.mxu0 0
    %351 = vmatprep.subr.bf16.mxu0 0
    %352 = vmatpush1.bf16.msra.mxu0 0
    %353 = vmatprep.subr.bf16.mxu0 0
    %354 = vmatpush1.bf16.msra.mxu0 0
    %355 = vmatprep.subr.bf16.mxu0 0
    %356 = vmatpush1.bf16.msra.mxu0 0
    %357 = vmatprep.subr.bf16.mxu0 0
    %358 = vmatpush1.bf16.msra.mxu0 0
    %359 = vmatprep.subr.bf16.mxu0 0
    %360 = vmatpush1.bf16.msra.mxu0 0
    %361 = vmatprep.subr.bf16.mxu0 0
    %362 = vmatpush1.bf16.msra.mxu0 0
    %363 = vmatprep.subr.bf16.mxu0 0
    %364 = vmatpush1.bf16.msra.mxu0 0
    %365 = vmatprep.subr.bf16.mxu0 0
    %366 = vmatpush1.bf16.msra.mxu0 0
    %367 = vmatprep.subr.bf16.mxu0 0
    %368 = vmatpush1.bf16.msra.mxu0 0
    %369 = vmatprep.subr.bf16.mxu0 0
    %370 = vmatpush1.bf16.msra.mxu0 0
    %371 = vmatprep.subr.bf16.mxu0 0
    %372 = vmatpush1.bf16.msra.mxu0 0
    %373 = vmatprep.mubr.bf16.mxu0 0
    %374 = vmatmul.mubr.bf16.gmra.mrb[0].mxu0 %v318
    %v375 = vpop.f32.mrb[0].mxu0
    %v376 = vadd.f32 %v303, %v375
    %v377 = vpop.f32.mrb[0].mxu0
    %v378 = vpop.f32.mrb[0].mxu0
    %v379 = vadd.f32 %v303, %v378
    %v380 = vpop.f32.mrb[0].mxu0
    %381 = vmatprep.mubr.bf16.mxu0 0
    %382 = vmatmul.mubr.bf16.gmra.mrb[0].mxu0 %v321
    %v383 = vpop.f32.mrb[0].mxu0
    %v384 = vadd.f32 %v303, %v383
    %v385 = vpop.f32.mrb[0].mxu0
    %v386 = vpop.f32.mrb[0].mxu0
    %v387 = vadd.f32 %v303, %v386
    %v388 = vpop.f32.mrb[0].mxu0
    %389 = vmatprep.mubr.bf16.mxu0 0
    %390 = vmatmul.mubr.bf16.gmra.mrb[0].mxu0 %v324
    %v391 = vpop.f32.mrb[0].mxu0
    %v392 = vadd.f32 %v303, %v391
    %v393 = vpop.f32.mrb[0].mxu0
    %v394 = vpop.f32.mrb[0].mxu0
    %v395 = vadd.f32 %v303, %v394
    %v396 = vpop.f32.mrb[0].mxu0
    %397 = vmatprep.mubr.bf16.mxu0 0
    %398 = vmatmul.mubr.bf16.gmra.mrb[0].mxu0 %v327
    %v399 = vpop.f32.mrb[0].mxu0
    %v400 = vadd.f32 %v303, %v399
    %v401 = vpop.f32.mrb[0].mxu0
    %v402 = vpop.f32.mrb[0].mxu0
    %v403 = vadd.f32 %v303, %v402
    %v404 = vpop.f32.mrb[0].mxu0
    %405 = vmatprep.mubr.bf16.mxu0 0
    %406 = vmatmul.mubr.bf16.gmra.mrb[0].mxu0 %v330
    %v407 = vpop.f32.mrb[0].mxu0
    %v408 = vadd.f32 %v303, %v407
    %v409 = vpop.f32.mrb[0].mxu0
    %v410 = vpop.f32.mrb[0].mxu0
    %v411 = vadd.f32 %v303, %v410
    %v412 = vpop.f32.mrb[0].mxu0
    %413 = vmatprep.mubr.bf16.mxu0 0
    %414 = vmatmul.mubr.bf16.gmra.mrb[0].mxu0 %v333
    %v415 = vpop.f32.mrb[0].mxu0
    %v416 = vadd.f32 %v303, %v415
    %v417 = vpop.f32.mrb[0].mxu0
    %v418 = vpop.f32.mrb[0].mxu0
    %v419 = vadd.f32 %v303, %v418
    %v420 = vpop.f32.mrb[0].mxu0
    %421 = vmatprep.mubr.bf16.mxu0 0
    %422 = vmatmul.mubr.bf16.gmra.mrb[0].mxu0 %v336
    %v423 = vpop.f32.mrb[0].mxu0
    %v424 = vadd.f32 %v303, %v423
    %v425 = vpop.f32.mrb[0].mxu0
    %v426 = vpop.f32.mrb[0].mxu0
    %v427 = vadd.f32 %v303, %v426
    %v428 = vpop.f32.mrb[0].mxu0
    %429 = vmatprep.mubr.bf16.mxu0 0
    %430 = vmatmul.mubr.bf16.gmra.mrb[0].mxu0 %v339
    %v431 = vpop.f32.mrb[0].mxu0
    %v432 = vadd.f32 %v303, %v431
    %v433 = vpop.f32.mrb[0].mxu0
    %v434 = vpop.f32.mrb[0].mxu0
    %v435 = vadd.f32 %v303, %v434
    %v436 = vpop.f32.mrb[0].mxu0
    %437 = vdwg.mxu0
    %438 = vmax.xlane.f32.xlu0 %v376
    %v439 = vpop.xlane.xlu0 %438
    %440 = vmax.xlane.f32.xlu0 %v379
    %v441 = vpop.xlane.xlu0 %440
    %442 = vmax.xlane.f32.xlu0 %v384
    %v443 = vpop.xlane.xlu0 %442
    %444 = vmax.xlane.f32.xlu0 %v387
    %v445 = vpop.xlane.xlu0 %444
    %446 = vmax.xlane.f32.xlu0 %v392
    %v447 = vpop.xlane.xlu0 %446
    %448 = vmax.xlane.f32.xlu0 %v395
    %v449 = vpop.xlane.xlu0 %448
    %450 = vmax.xlane.f32.xlu0 %v400
    %v451 = vpop.xlane.xlu0 %450
    %452 = vmax.xlane.f32.xlu0 %v403
    %v453 = vpop.xlane.xlu0 %452
    %454 = vmax.xlane.f32.xlu0 %v408
    %v455 = vpop.xlane.xlu0 %454
    %456 = vmax.xlane.f32.xlu0 %v411
    %v457 = vpop.xlane.xlu0 %456
    %458 = vmax.xlane.f32.xlu0 %v416
    %v459 = vpop.xlane.xlu0 %458
    %460 = vmax.xlane.f32.xlu0 %v419
    %v461 = vpop.xlane.xlu0 %460
    %462 = vmax.xlane.f32.xlu0 %v424
    %v463 = vpop.xlane.xlu0 %462
    %464 = vmax.xlane.f32.xlu0 %v427
    %v465 = vpop.xlane.xlu0 %464
    %466 = vmax.xlane.f32.xlu0 %v432
    %v467 = vpop.xlane.xlu0 %466
    %468 = vmax.xlane.f32.xlu0 %v435
    %v469 = vpop.xlane.xlu0 %468
    %v470 = vsub.f32 %v376, %v439
    %v471 = vsub.f32 %v379, %v441
    %v472 = vsub.f32 %v384, %v443
    %v473 = vsub.f32 %v387, %v445
    %v474 = vsub.f32 %v392, %v447
    %v475 = vsub.f32 %v395, %v449
    %v476 = vsub.f32 %v400, %v451
    %v477 = vsub.f32 %v403, %v453
    %v478 = vsub.f32 %v408, %v455
    %v479 = vsub.f32 %v411, %v457
    %v480 = vsub.f32 %v416, %v459
    %v481 = vsub.f32 %v419, %v461
    %v482 = vsub.f32 %v424, %v463
    %v483 = vsub.f32 %v427, %v465
    %v484 = vsub.f32 %v432, %v467
    %v485 = vsub.f32 %v435, %v469
    %v486 = vmul.f32 %v470, 1.442695
    %v487 = vpow.pop %v486
    %v488 = vmul.f32 %v471, 1.442695
    %v489 = vpow.pop %v488
    %v490 = vmul.f32 %v472, 1.442695
    %v491 = vpow.pop %v490
    %v492 = vmul.f32 %v473, 1.442695
    %v493 = vpow.pop %v492
    %v494 = vmul.f32 %v474, 1.442695
    %v495 = vpow.pop %v494
    %v496 = vmul.f32 %v475, 1.442695
    %v497 = vpow.pop %v496
    %v498 = vmul.f32 %v476, 1.442695
    %v499 = vpow.pop %v498
    %v500 = vmul.f32 %v477, 1.442695
    %v501 = vpow.pop %v500
    %v502 = vmul.f32 %v478, 1.442695
    %v503 = vpow.pop %v502
    %v504 = vmul.f32 %v479, 1.442695
    %v505 = vpow.pop %v504
    %v506 = vmul.f32 %v480, 1.442695
    %v507 = vpow.pop %v506
    %v508 = vmul.f32 %v481, 1.442695
    %v509 = vpow.pop %v508
    %v510 = vmul.f32 %v482, 1.442695
    %v511 = vpow.pop %v510
    %v512 = vmul.f32 %v483, 1.442695
    %v513 = vpow.pop %v512
    %v514 = vmul.f32 %v484, 1.442695
    %v515 = vpow.pop %v514
    %v516 = vmul.f32 %v485, 1.442695
    %v517 = vpow.pop %v516
    %518 = vadd.xlane.f32.xlu0 %v487
    %v519 = vpop.xlane.xlu0 %518
    %520 = vadd.xlane.f32.xlu0 %v489
    %v521 = vpop.xlane.xlu0 %520
    %522 = vadd.xlane.f32.xlu0 %v491
    %v523 = vpop.xlane.xlu0 %522
    %524 = vadd.xlane.f32.xlu0 %v493
    %v525 = vpop.xlane.xlu0 %524
    %526 = vadd.xlane.f32.xlu0 %v495
    %v527 = vpop.xlane.xlu0 %526
    %528 = vadd.xlane.f32.xlu0 %v497
    %v529 = vpop.xlane.xlu0 %528
    %530 = vadd.xlane.f32.xlu0 %v499
    %v531 = vpop.xlane.xlu0 %530
    %532 = vadd.xlane.f32.xlu0 %v501
    %v533 = vpop.xlane.xlu0 %532
    %534 = vadd.xlane.f32.xlu0 %v503
    %v535 = vpop.xlane.xlu0 %534
    %536 = vadd.xlane.f32.xlu0 %v505
    %v537 = vpop.xlane.xlu0 %536
    %538 = vadd.xlane.f32.xlu0 %v507
    %v539 = vpop.xlane.xlu0 %538
    %540 = vadd.xlane.f32.xlu0 %v509
    %v541 = vpop.xlane.xlu0 %540
    %542 = vadd.xlane.f32.xlu0 %v511
    %v543 = vpop.xlane.xlu0 %542
    %544 = vadd.xlane.f32.xlu0 %v513
    %v545 = vpop.xlane.xlu0 %544
    %546 = vadd.xlane.f32.xlu0 %v515
    %v547 = vpop.xlane.xlu0 %546
    %548 = vadd.xlane.f32.xlu0 %v517
    %v549 = vpop.xlane.xlu0 %548
    %v550 = vlog2.pop %v519
    %v551 = vmul.f32 %v550, 0.6931472
    %v552 = vlog2.pop %v521
    %v553 = vmul.f32 %v552, 0.6931472
    %v554 = vlog2.pop %v523
    %v555 = vmul.f32 %v554, 0.6931472
    %v556 = vlog2.pop %v525
    %v557 = vmul.f32 %v556, 0.6931472
    %v558 = vlog2.pop %v527
    %v559 = vmul.f32 %v558, 0.6931472
    %v560 = vlog2.pop %v529
    %v561 = vmul.f32 %v560, 0.6931472
    %v562 = vlog2.pop %v531
    %v563 = vmul.f32 %v562, 0.6931472
    %v564 = vlog2.pop %v533
    %v565 = vmul.f32 %v564, 0.6931472
    %v566 = vlog2.pop %v535
    %v567 = vmul.f32 %v566, 0.6931472
    %v568 = vlog2.pop %v537
    %v569 = vmul.f32 %v568, 0.6931472
    %v570 = vlog2.pop %v539
    %v571 = vmul.f32 %v570, 0.6931472
    %v572 = vlog2.pop %v541
    %v573 = vmul.f32 %v572, 0.6931472
    %v574 = vlog2.pop %v543
    %v575 = vmul.f32 %v574, 0.6931472
    %v576 = vlog2.pop %v545
    %v577 = vmul.f32 %v576, 0.6931472
    %v578 = vlog2.pop %v547
    %v579 = vmul.f32 %v578, 0.6931472
    %v580 = vlog2.pop %v549
    %v581 = vmul.f32 %v580, 0.6931472
    %v582 = vadd.f32 %v439, %v551
    %v583 = vadd.f32 %v441, %v553
    %v584 = vadd.f32 %v443, %v555
    %v585 = vadd.f32 %v445, %v557
    %v586 = vadd.f32 %v447, %v559
    %v587 = vadd.f32 %v449, %v561
    %v588 = vadd.f32 %v451, %v563
    %v589 = vadd.f32 %v453, %v565
    %v590 = vadd.f32 %v455, %v567
    %v591 = vadd.f32 %v457, %v569
    %v592 = vadd.f32 %v459, %v571
    %v593 = vadd.f32 %v461, %v573
    %v594 = vadd.f32 %v463, %v575
    %v595 = vadd.f32 %v465, %v577
    %v596 = vadd.f32 %v467, %v579
    %v597 = vadd.f32 %v469, %v581
    %v598 = vld [vmem:[%s2] sm:$0xff]
    %v599 = vld [vmem:[%s2 + $0x8] sm:$0xff]
    %v600 = vld [vmem:[%s2 + $0x10] sm:$0xff]
    %v601 = vld [vmem:[%s2 + $0x18] sm:$0xff]
    %v602 = vld [vmem:[%s2 + $0x20] sm:$0xff]
    %v603 = vld [vmem:[%s2 + $0x28] sm:$0xff]
    %v604 = vld [vmem:[%s2 + $0x30] sm:$0xff]
    %v605 = vld [vmem:[%s2 + $0x38] sm:$0xff]
    %v606 = vld [vmem:[%s2 + $0x40] sm:$0xff]
    %v607 = vld [vmem:[%s2 + $0x48] sm:$0xff]
    %v608 = vld [vmem:[%s2 + $0x50] sm:$0xff]
    %v609 = vld [vmem:[%s2 + $0x58] sm:$0xff]
    %v610 = vld [vmem:[%s2 + $0x60] sm:$0xff]
    %v611 = vld [vmem:[%s2 + $0x68] sm:$0xff]
    %v612 = vld [vmem:[%s2 + $0x70] sm:$0xff]
    %v613 = vld [vmem:[%s2 + $0x78] sm:$0xff]
    %v614 = vlaneseq
    %v615 = vand.u32 %v614, 127
    %616 = vset.pattern.permute.xlu0 0
    %617 = vperm.xlu0 %616, %v598
    %v618 = vpop.permute.xlu0 %617
    %619 = vset.pattern.permute.xlu0 0
    %620 = vperm.xlu0 %619, %v599
    %v621 = vpop.permute.xlu0 %620
    %622 = vset.pattern.permute.xlu0 0
    %623 = vperm.xlu0 %622, %v600
    %v624 = vpop.permute.xlu0 %623
    %625 = vset.pattern.permute.xlu0 0
    %626 = vperm.xlu0 %625, %v601
    %v627 = vpop.permute.xlu0 %626
    %628 = vset.pattern.permute.xlu0 0
    %629 = vperm.xlu0 %628, %v602
    %v630 = vpop.permute.xlu0 %629
    %631 = vset.pattern.permute.xlu0 0
    %632 = vperm.xlu0 %631, %v603
    %v633 = vpop.permute.xlu0 %632
    %634 = vset.pattern.permute.xlu0 0
    %635 = vperm.xlu0 %634, %v604
    %v636 = vpop.permute.xlu0 %635
    %637 = vset.pattern.permute.xlu0 0
    %638 = vperm.xlu0 %637, %v605
    %v639 = vpop.permute.xlu0 %638
    %640 = vset.pattern.permute.xlu0 0
    %641 = vperm.xlu0 %640, %v606
    %v642 = vpop.permute.xlu0 %641
    %643 = vset.pattern.permute.xlu0 0
    %644 = vperm.xlu0 %643, %v607
    %v645 = vpop.permute.xlu0 %644
    %646 = vset.pattern.permute.xlu0 0
    %647 = vperm.xlu0 %646, %v608
    %v648 = vpop.permute.xlu0 %647
    %649 = vset.pattern.permute.xlu0 0
    %650 = vperm.xlu0 %649, %v609
    %v651 = vpop.permute.xlu0 %650
    %652 = vset.pattern.permute.xlu0 0
    %653 = vperm.xlu0 %652, %v610
    %v654 = vpop.permute.xlu0 %653
    %655 = vset.pattern.permute.xlu0 0
    %656 = vperm.xlu0 %655, %v611
    %v657 = vpop.permute.xlu0 %656
    %658 = vset.pattern.permute.xlu0 0
    %659 = vperm.xlu0 %658, %v612
    %v660 = vpop.permute.xlu0 %659
    %661 = vset.pattern.permute.xlu0 0
    %662 = vperm.xlu0 %661, %v613
    %v663 = vpop.permute.xlu0 %662
    %vm664 = vcmp.eq.s32.totalorder %v618, %v615
    %vm665 = vcmp.eq.s32.totalorder %v621, %v615
    %vm666 = vcmp.eq.s32.totalorder %v624, %v615
    %vm667 = vcmp.eq.s32.totalorder %v627, %v615
    %vm668 = vcmp.eq.s32.totalorder %v630, %v615
    %vm669 = vcmp.eq.s32.totalorder %v633, %v615
    %vm670 = vcmp.eq.s32.totalorder %v636, %v615
    %vm671 = vcmp.eq.s32.totalorder %v639, %v615
    %vm672 = vcmp.eq.s32.totalorder %v642, %v615
    %vm673 = vcmp.eq.s32.totalorder %v645, %v615
    %vm674 = vcmp.eq.s32.totalorder %v648, %v615
    %vm675 = vcmp.eq.s32.totalorder %v651, %v615
    %vm676 = vcmp.eq.s32.totalorder %v654, %v615
    %vm677 = vcmp.eq.s32.totalorder %v657, %v615
    %vm678 = vcmp.eq.s32.totalorder %v660, %v615
    %vm679 = vcmp.eq.s32.totalorder %v663, %v615
    %v680 = vsel %vm664, 1, 0
    %v681 = vsel %vm665, 1, 0
    %v682 = vsel %vm666, 1, 0
    %v683 = vsel %vm667, 1, 0
    %v684 = vsel %vm668, 1, 0
    %v685 = vsel %vm669, 1, 0
    %v686 = vsel %vm670, 1, 0
    %v687 = vsel %vm671, 1, 0
    %v688 = vsel %vm672, 1, 0
    %v689 = vsel %vm673, 1, 0
    %v690 = vsel %vm674, 1, 0
    %v691 = vsel %vm675, 1, 0
    %v692 = vsel %vm676, 1, 0
    %v693 = vsel %vm677, 1, 0
    %v694 = vsel %vm678, 1, 0
    %v695 = vsel %vm679, 1, 0
    %v696 = vcvt.s32.f32 %v680
    %v697 = vcvt.s32.f32 %v681
    %v698 = vcvt.s32.f32 %v682
    %v699 = vcvt.s32.f32 %v683
    %v700 = vcvt.s32.f32 %v684
    %v701 = vcvt.s32.f32 %v685
    %v702 = vcvt.s32.f32 %v686
    %v703 = vcvt.s32.f32 %v687
    %v704 = vcvt.s32.f32 %v688
    %v705 = vcvt.s32.f32 %v689
    %v706 = vcvt.s32.f32 %v690
    %v707 = vcvt.s32.f32 %v691
    %v708 = vcvt.s32.f32 %v692
    %v709 = vcvt.s32.f32 %v693
    %v710 = vcvt.s32.f32 %v694
    %v711 = vcvt.s32.f32 %v695
    %v712 = vmul.f32 %v376, %v696
    %v713 = vmul.f32 %v379, %v697
    %v714 = vmul.f32 %v384, %v698
    %v715 = vmul.f32 %v387, %v699
    %v716 = vmul.f32 %v392, %v700
    %v717 = vmul.f32 %v395, %v701
    %v718 = vmul.f32 %v400, %v702
    %v719 = vmul.f32 %v403, %v703
    %v720 = vmul.f32 %v408, %v704
    %v721 = vmul.f32 %v411, %v705
    %v722 = vmul.f32 %v416, %v706
    %v723 = vmul.f32 %v419, %v707
    %v724 = vmul.f32 %v424, %v708
    %v725 = vmul.f32 %v427, %v709
    %v726 = vmul.f32 %v432, %v710
    %v727 = vmul.f32 %v435, %v711
    %728 = vadd.xlane.f32.xlu0 %v712
    %v729 = vpop.xlane.xlu0 %728
    %730 = vadd.xlane.f32.xlu0 %v713
    %v731 = vpop.xlane.xlu0 %730
    %732 = vadd.xlane.f32.xlu0 %v714
    %v733 = vpop.xlane.xlu0 %732
    %734 = vadd.xlane.f32.xlu0 %v715
    %v735 = vpop.xlane.xlu0 %734
    %736 = vadd.xlane.f32.xlu0 %v716
    %v737 = vpop.xlane.xlu0 %736
    %738 = vadd.xlane.f32.xlu0 %v717
    %v739 = vpop.xlane.xlu0 %738
    %740 = vadd.xlane.f32.xlu0 %v718
    %v741 = vpop.xlane.xlu0 %740
    %742 = vadd.xlane.f32.xlu0 %v719
    %v743 = vpop.xlane.xlu0 %742
    %744 = vadd.xlane.f32.xlu0 %v720
    %v745 = vpop.xlane.xlu0 %744
    %746 = vadd.xlane.f32.xlu0 %v721
    %v747 = vpop.xlane.xlu0 %746
    %748 = vadd.xlane.f32.xlu0 %v722
    %v749 = vpop.xlane.xlu0 %748
    %750 = vadd.xlane.f32.xlu0 %v723
    %v751 = vpop.xlane.xlu0 %750
    %752 = vadd.xlane.f32.xlu0 %v724
    %v753 = vpop.xlane.xlu0 %752
    %754 = vadd.xlane.f32.xlu0 %v725
    %v755 = vpop.xlane.xlu0 %754
    %756 = vadd.xlane.f32.xlu0 %v726
    %v757 = vpop.xlane.xlu0 %756
    %758 = vadd.xlane.f32.xlu0 %v727
    %v759 = vpop.xlane.xlu0 %758
    %v760 = vsub.f32 %v582, %v729
    %v761 = vsub.f32 %v583, %v731
    %v762 = vsub.f32 %v584, %v733
    %v763 = vsub.f32 %v585, %v735
    %v764 = vsub.f32 %v586, %v737
    %v765 = vsub.f32 %v587, %v739
    %v766 = vsub.f32 %v588, %v741
    %v767 = vsub.f32 %v589, %v743
    %v768 = vsub.f32 %v590, %v745
    %v769 = vsub.f32 %v591, %v747
    %v770 = vsub.f32 %v592, %v749
    %v771 = vsub.f32 %v593, %v751
    %v772 = vsub.f32 %v594, %v753
    %v773 = vsub.f32 %v595, %v755
    %v774 = vsub.f32 %v596, %v757
    %v775 = vsub.f32 %v597, %v759
    %v776 = vadd.f32 %v760, %v761
    %v777 = vadd.f32 %v776, %v762
    %v778 = vadd.f32 %v777, %v763
    %v779 = vadd.f32 %v778, %v764
    %v780 = vadd.f32 %v779, %v765
    %v781 = vadd.f32 %v780, %v766
    %v782 = vadd.f32 %v781, %v767
    %v783 = vadd.f32 %v782, %v768
    %v784 = vadd.f32 %v783, %v769
    %v785 = vadd.f32 %v784, %v770
    %v786 = vadd.f32 %v785, %v771
    %v787 = vadd.f32 %v786, %v772
    %v788 = vadd.f32 %v787, %v773
    %v789 = vadd.f32 %v788, %v774
    %v790 = vadd.f32 %v789, %v775
    %v791 = vrot.slane %v790, 4
    %v792 = vadd.f32 %v790, %v791
    %v793 = vrot.slane %v792, 2
    %v794 = vadd.f32 %v792, %v793
    %v795 = vrot.slane %v794, 1
    %v796 = vadd.f32 %v794, %v795
    %v797 = vmul.f32 %v796, 0.0078125
    %vm798 = vcmask 0
    %799 = vst.msk [vmem:[#allocation2] sm:$0x1] %vm798, %v797
    // Predicated region
    $region22: #{angle_head_loss.1} parent=1 // pred_check
      _
    $region23: #{angle_head_loss.1} parent=1 // pred_check_branch
      %801 = sbr.rel (0) target = $region25
    $region24: #{angle_head_loss.1} parent=1 // pred_region
      %s803 = ssub.s32 16, 16
      %804 = vsyncadd [#allocation3], %s803
      %s806 = sshll.u32 [#allocation2], 4
      %s807 = int_to_ptr.vmem [resolvable:$true] %s806
      %809 = dma.vmem_to_hbm [thread:$0]  %s807, 16, %s5, [#allocation3]
    $region25: #{angle_head_loss.1} parent=1 // pred_fallthru
      _
    // Predicated region
    $region26: #{angle_head_loss.1} parent=1 // pred_check
      _
    $region27: #{angle_head_loss.1} parent=1 // pred_check_branch
      %811 = sbr.rel (0) target = $region29
    $region28: #{angle_head_loss.1} parent=1 // pred_region
      %812 = dma.done [#allocation3], 16
    $region29: #{angle_head_loss.1} parent=1 // pred_fallthru
      _
    %813 = vsyncpa [#allocation3], 1

</llo_original>
